<compile_context>
chip_gen: v5e
topology: v5e:2x2
jax: 0.10.0
libtpu: 0.0.40
codegen_flags: <defaults>
</compile_context>

<pallas_src>
import functools

import jax
import jax.numpy as jnp
import numpy as np
from jax import lax
from jax.experimental import pallas as pl
from jax.experimental.pallas import tpu as pltpu

_LANES = 128


def _round_up(x, m):
    return (x + m - 1) // m * m


def _tpu_generation_params():
    """(vmem_limit_bytes, mxu_n_width) derived from the local TPU generation.

    v5e/v5p/v6e have 128 MiB of VMEM per TensorCore, v7x only 64 MiB.  The MXU
    is 128 wide in N on v5, 256 wide on v6e/v7x.  Unknown parts get the
    conservative (v7x-safe) settings."""
    try:
        kind = jax.devices()[0].device_kind.lower()
    except Exception:  # pragma: no cover - no TPU visible
        kind = ""
    if "v5" in kind or "v6" in kind:
        vmem_limit = 96 * 1024 * 1024
    else:  # v7x or unknown: 64 MiB physical -> stay conservative
        vmem_limit = 48 * 1024 * 1024
    mxu_n = 128 if "v5" in kind else 256
    return vmem_limit, mxu_n


def _fit_tile(extent, tile):
    """Pick a row tile <= `tile`.  Prefer a divisor of `extent`; if the best
    divisor is poor (< tile/2), keep `tile` and pad `extent` up to a multiple
    (padded rows are masked out of the statistics in-kernel)."""
    tile = max(1, min(int(tile), extent))
    d = tile
    while extent % d:
        d -= 1
    if d == extent or d >= max(tile // 2, 1):
        return d, extent
    return tile, _round_up(extent, tile)


def _plan_phase1_rows(ho, wo, c, toc, budget_bytes):
    wc = wo + 1
    per_row = (2 * wc * 6 * c * 2      # packed input plane block (bf16, double-buffered)
               + 2 * wo * toc * 2      # bf16 y output block (double-buffered)
               + wo * 9 * c * 2        # lhs_a / lhs_b slice copies
               + 2 * wo * toc * 4)     # f32 MXU accumulator + store temp
    fixed = 2 * (9 * c * toc * 2) + 8 * toc * 4 + (2 << 20)
    th = max(1, (budget_bytes - fixed) // per_row)
    return _fit_tile(ho, th)


def _plan_phase2_rows(ho_pad, wo, ocp, oc, out_bytes, budget_bytes):
    per_row = (2 * wo * ocp * 2            # bf16 y input block (double-buffered)
               + 2 * wo * oc * out_bytes   # output block (double-buffered)
               + wo * ocp * 4)             # f32 temp
    th = max(1, (budget_bytes - (1 << 20)) // per_row)
    th = min(th, ho_pad)
    while ho_pad % th:
        th -= 1
    return th


# ---------------------------------------------------------------------------
# Phase 1: 3x3 stride-2 conv as two deep MXU dots, per output-row tile, plus
# per-(image, channel) sum / sum-of-squares accumulation for InstanceNorm.
# ---------------------------------------------------------------------------
def _conv_stats_kernel(r_ref, wa_ref, wb_ref, y_ref, s1_ref, s2_ref, *,
                       valid_rows):
    """r_ref : (th, wo+1, 6C) bf16 packed plane
               channels [ki*C:(ki+1)*C]        = x_pad[2h+ki, 2w,   :]
               channels [3C+ki*C:3C+(ki+1)*C]  = x_pad[2h+ki, 2w+1, :]
       wa_ref: (6C, toc)  weights for taps (ki, kj=0) and (ki, kj=1)
       wb_ref: (3C, toc)  weights for taps (ki, kj=2)"""
    th, wo, toc = y_ref.shape
    c6 = wa_ref.shape[0]
    c3 = wb_ref.shape[0]

    r = r_ref[...]                                       # (th, wo+1, 6C)
    lhs_a = r[:, :wo, :].reshape(th * wo, c6)
    # TODO(synk): if the Mosaic dump shows a relayout for this +1 sublane
    # offset, switch to pltpu.roll(r, wo, axis=1)[:, :wo, :c3] (XLU slot).
    lhs_b = r[:, 1:wo + 1, :c3].reshape(th * wo, c3)

    acc = jnp.dot(lhs_a, wa_ref[...], preferred_element_type=jnp.float32)
    acc = acc + jnp.dot(lhs_b, wb_ref[...], preferred_element_type=jnp.float32)

    @pl.when(pl.program_id(2) == 0)
    def _():
        s1_ref[...] = jnp.zeros_like(s1_ref)
        s2_ref[...] = jnp.zeros_like(s2_ref)

    if valid_rows is None:
        ys = acc
    else:
        row = (pl.program_id(2) * th
               + lax.broadcasted_iota(jnp.int32, (th * wo, 1), 0) // wo)
        ys = jnp.where(row < valid_rows, acc, 0.0)
    s1_ref[...] += jnp.sum(ys, axis=0, keepdims=True)
    s2_ref[...] += jnp.sum(ys * ys, axis=0, keepdims=True)

    y_ref[...] = acc.reshape(th, wo, toc).astype(y_ref.dtype)


# ---------------------------------------------------------------------------
# Phase 2: y * scale + shift (InstanceNorm finalize and/or bias) + activation.
# ---------------------------------------------------------------------------
def _norm_act_kernel(y_ref, scale_ref, shift_ref, o_ref, *, negative_slope):
    y = y_ref[...].astype(jnp.float32)                   # (th2, wo, ocp)
    y = y * scale_ref[...] + shift_ref[...]              # (1, ocp) broadcasts
    if negative_slope == 0.0:
        y = jnp.maximum(y, 0.0)                          # ReLU
    else:
        y = jnp.where(y >= 0.0, y, negative_slope * y)   # LeakyReLU(0.2)
    oc = o_ref.shape[-1]
    o_ref[...] = y[..., :oc].astype(o_ref.dtype)


def contracting_block_nhwc(x, weight, bias, *, use_bn=True, activation="relu",
                           eps=1e-5, compute_dtype=jnp.bfloat16, out_dtype=None,
                           row_tile=None, oc_tile=None):
    """ContractingBlock forward, NHWC in / NHWC out.

    x: (N, H, W, C); weight: (2C, C, 3, 3) torch OIHW; bias: (2C,).
    Returns (N, H//2, W//2, 2C)."""
    n, h, w, c = x.shape
    oc = weight.shape[0]
    assert weight.shape == (oc, c, 3, 3)
    # TODO(synk): odd H/W (PyTorch emits ceil(H/2) outputs) is not supported.
    assert h % 2 == 0 and w % 2 == 0, "even spatial dims expected for stride 2"
    ho, wo = h // 2, w // 2
    wc = wo + 1
    out_dtype = x.dtype if out_dtype is None else out_dtype
    out_bytes = jnp.dtype(out_dtype).itemsize

    vmem_limit, mxu_n = _tpu_generation_params()
    budget = (vmem_limit * 7) // 10              # leave compiler headroom

    ocp = _round_up(max(oc, _LANES), _LANES)     # lane-dense output channels
    if oc_tile is None:
        toc = 256 if (mxu_n >= 256 and ocp % 256 == 0) else _LANES
        # keep >= 2 parallel grid blocks so both v7x TensorCores stay busy
        if n * (ocp // toc) < 2 and ocp // _LANES >= 2:
            toc = _LANES
    else:
        toc = oc_tile
    toc = min(toc, ocp)
    assert ocp % toc == 0

    if row_tile is None:
        th, ho_pad = _plan_phase1_rows(ho, wo, c, toc, budget)
    else:
        th, ho_pad = row_tile, _round_up(ho, row_tile)

    # ---- layout plumbing (plain XLA): reflect-pad, cast, pack one plane -----
    xp = jnp.pad(x.astype(compute_dtype), ((0, 0), (1, 1), (1, 1), (0, 0)),
                 mode="reflect")                             # (n, H+2, W+2, C)
    rows = [xp[:, ki:ki + 2 * ho:2].reshape(n, ho, wc, 2, c) for ki in range(3)]
    r_packed = jnp.concatenate(
        [rows[0][..., 0, :], rows[1][..., 0, :], rows[2][..., 0, :],
         rows[0][..., 1, :], rows[1][..., 1, :], rows[2][..., 1, :]],
        axis=-1)                                             # (n, ho, wo+1, 6C)
    if ho_pad != ho:
        r_packed = jnp.pad(r_packed, ((0, 0), (0, ho_pad - ho), (0, 0), (0, 0)))

    # weights: (oc, C, 3, 3) OIHW -> (3, 3, C, oc), split by column tap.
    wt = jnp.transpose(weight, (2, 3, 1, 0)).astype(compute_dtype)
    w_a = jnp.concatenate([wt[:, 0].reshape(3 * c, oc),
                           wt[:, 1].reshape(3 * c, oc)], axis=0)   # (6C, oc)
    w_b = wt[:, 2].reshape(3 * c, oc)                              # (3C, oc)
    w_a = jnp.pad(w_a, ((0, 0), (0, ocp - oc)))
    w_b = jnp.pad(w_b, ((0, 0), (0, ocp - oc)))

    grid1 = (n, ocp // toc, ho_pad // th)
    r_spec = pl.BlockSpec((pl.Squeezed(), th, wc, 6 * c),
                          lambda ni, j, hi: (ni, hi, 0, 0))
    wa_spec = pl.BlockSpec((6 * c, toc), lambda ni, j, hi: (0, j))
    wb_spec = pl.BlockSpec((3 * c, toc), lambda ni, j, hi: (0, j))
    y_spec = pl.BlockSpec((pl.Squeezed(), th, wo, toc),
                          lambda ni, j, hi: (ni, hi, 0, j))
    st_spec = pl.BlockSpec((pl.Squeezed(), 1, toc), lambda ni, j, hi: (ni, 0, j))

    conv_kernel = functools.partial(
        _conv_stats_kernel, valid_rows=None if ho_pad == ho else ho)

    y, s1, s2 = pl.pallas_call(
        conv_kernel,
        out_shape=(jax.ShapeDtypeStruct((n, ho_pad, wo, ocp), compute_dtype),
                   jax.ShapeDtypeStruct((n, 1, ocp), jnp.float32),
                   jax.ShapeDtypeStruct((n, 1, ocp), jnp.float32)),
        grid_spec=pltpu.PrefetchScalarGridSpec(
            num_scalar_prefetch=0,
            grid=grid1,
            in_specs=[r_spec, wa_spec, wb_spec],
            out_specs=[y_spec, st_spec, st_spec]),
        compiler_params=pltpu.CompilerParams(
            dimension_semantics=("parallel", "parallel", "arbitrary"),
            vmem_limit_bytes=vmem_limit),
    )(r_packed, w_a, w_b)

    # ---- per-(image, channel) scale / shift (tiny XLA op) -------------------
    # The conv bias is never added in phase 1: with InstanceNorm it cancels,
    # and without it is folded into phase-2's shift.  Single-pass
    # E[y^2]-E[y]^2 is clamped at 0; fine in f32 for typical image sizes.
    if use_bn:
        inv_hw = 1.0 / float(ho * wo)
        mean = s1 * inv_hw
        var = jnp.maximum(s2 * inv_hw - mean * mean, 0.0)
        scale = lax.rsqrt(var + eps)
        shift = -mean * scale
    else:
        scale = jnp.ones((n, 1, ocp), jnp.float32)
        shift = jnp.broadcast_to(
            jnp.pad(bias.astype(jnp.float32), (0, ocp - oc)).reshape(1, 1, ocp),
            (n, 1, ocp))

    # ---- phase 2: normalize + activation, independently tiled ---------------
    th2 = _plan_phase2_rows(ho_pad, wo, ocp, oc, out_bytes, budget)
    grid2 = (n, ho_pad // th2)
    y_in_spec = pl.BlockSpec((pl.Squeezed(), th2, wo, ocp),
                             lambda ni, hi: (ni, hi, 0, 0))
    ss_spec = pl.BlockSpec((pl.Squeezed(), 1, ocp), lambda ni, hi: (ni, 0, 0))
    o_spec = pl.BlockSpec((pl.Squeezed(), th2, wo, oc),
                          lambda ni, hi: (ni, hi, 0, 0))

    norm_kernel = functools.partial(
        _norm_act_kernel,
        negative_slope=0.0 if activation == "relu" else 0.2)

    out = pl.pallas_call(
        norm_kernel,
        out_shape=jax.ShapeDtypeStruct((n, ho_pad, wo, oc), out_dtype),
        grid_spec=pltpu.PrefetchScalarGridSpec(
            num_scalar_prefetch=0,
            grid=grid2,
            in_specs=[y_in_spec, ss_spec, ss_spec],
            out_specs=o_spec),
        compiler_params=pltpu.CompilerParams(
            dimension_semantics=("parallel", "parallel"),
            vmem_limit_bytes=vmem_limit),
    )(y, scale, shift)

    if ho_pad != ho:                              # rare ragged-row case only
        out = out[:, :ho]
    return out


def contracting_block(x, weight, bias, *, use_bn=True, activation="relu",
                      eps=1e-5, compute_dtype=jnp.bfloat16):
    """PyTorch-parity entry point (NCHW in / NCHW out).  Inside a model, prefer
    contracting_block_nhwc and convert layouts only at the model boundaries."""
    y = contracting_block_nhwc(jnp.transpose(x, (0, 2, 3, 1)), weight, bias,
                               use_bn=use_bn, activation=activation, eps=eps,
                               compute_dtype=compute_dtype)
    return jnp.transpose(y, (0, 3, 1, 2))


# ---------------------------------------------------------------------------
# References for validation.
# ---------------------------------------------------------------------------
def _reference_f32(x, weight, bias, *, use_bn=True, eps=1e-5):
    """Pure-f32 ground truth mirroring the PyTorch forward (NCHW)."""
    xp = jnp.pad(x, ((0, 0), (0, 0), (1, 1), (1, 1)), mode="reflect")
    y = lax.conv_general_dilated(
        xp, weight, window_strides=(2, 2), padding="VALID",
        dimension_numbers=("NCHW", "OIHW", "NCHW"))
    y = y + bias.reshape(1, -1, 1, 1)
    if use_bn:
        mean = jnp.mean(y, axis=(2, 3), keepdims=True)
        var = jnp.mean(jnp.square(y - mean), axis=(2, 3), keepdims=True)
        y = (y - mean) * lax.rsqrt(var + eps)
    return jnp.maximum(y, 0.0)


def _reference_matched(x, weight, bias, *, use_bn=True, eps=1e-5,
                       compute_dtype=jnp.bfloat16):
    """Mirrors the kernel arithmetic: bf16 operands, f32 accumulation, f32 stats
    from the unrounded conv output, bf16 rounding of the stored intermediate
    before normalization, bias folded into the shift."""
    n, ci, h, w = x.shape
    oc = weight.shape[0]
    ho, wo = h // 2, w // 2
    xp = jnp.pad(x.astype(compute_dtype), ((0, 0), (0, 0), (1, 1), (1, 1)),
                 mode="reflect")
    taps = [xp[:, :, ki:ki + 2 * ho:2, kj:kj + 2 * wo:2]
            for ki in range(3) for kj in range(3)]           # 9 x (n, ci, ho, wo)
    p = jnp.stack(taps, axis=2)                              # (n, ci, 9, ho, wo)
    p = p.transpose(0, 3, 4, 1, 2).reshape(n, ho * wo, ci * 9)
    wf = weight.reshape(oc, ci * 9).astype(compute_dtype).T  # (ci*9, oc)
    y = jnp.einsum("npk,ko->npo", p, wf,
                   preferred_element_type=jnp.float32)       # (n, ho*wo, oc) f32
    if use_bn:
        mean = jnp.mean(y, axis=1, keepdims=True)
        var = jnp.maximum(jnp.mean(y * y, axis=1, keepdims=True) - mean * mean,
                          0.0)
        scale = lax.rsqrt(var + eps)
        shift = -mean * scale
    else:
        scale = jnp.ones((1, 1, oc), jnp.float32)
        shift = bias.astype(jnp.float32).reshape(1, 1, oc)
    yq = y.astype(compute_dtype).astype(jnp.float32)         # stored intermediate
    out = jnp.maximum(yq * scale + shift, 0.0)
    return out.reshape(n, ho, wo, oc).transpose(0, 3, 1, 2)  # NCHW


if __name__ == "__main__":
    key = jax.random.PRNGKey(0)
    kx, kw, kb = jax.random.split(key, 3)

    N, C, H, W = 2, 4, 16, 16
    OC = 2 * C

    x = jax.random.normal(kx, (N, C, H, W), dtype=jnp.float32)
    fan_in = C * 3 * 3
    bound = 1.0 / np.sqrt(fan_in)
    weight = jax.random.uniform(kw, (OC, C, 3, 3), jnp.float32, -bound, bound)
    bias = jax.random.uniform(kb, (OC,), jnp.float32, -bound, bound)

    out = contracting_block(x, weight, bias, use_bn=True, activation="relu")
    out = jax.block_until_ready(out)
    assert out.shape == (N, OC, H // 2, W // 2)

    # Check against a reference with matched arithmetic (bf16 operands, f32
    # accumulation, bf16 intermediate) -- tolerance covers one bf16 ULP of the
    # stored intermediate after normalization -- plus a loose check against the
    # pure-f32 ground truth.
    ref_m = jax.block_until_ready(_reference_matched(x, weight, bias, use_bn=True))
    np.testing.assert_allclose(np.asarray(out), np.asarray(ref_m),
                               rtol=1e-2, atol=2e-2)
    ref_f = jax.block_until_ready(_reference_f32(x, weight, bias, use_bn=True))
    np.testing.assert_allclose(np.asarray(out), np.asarray(ref_f),
                               rtol=7.5e-2, atol=7.5e-2)

    # No-InstanceNorm path: bias is applied via phase-2's shift.
    out_nb = jax.block_until_ready(
        contracting_block(x, weight, bias, use_bn=False, activation="relu"))
    ref_nb = jax.block_until_ready(_reference_f32(x, weight, bias, use_bn=False))
    np.testing.assert_allclose(np.asarray(out_nb), np.asarray(ref_nb),
                               rtol=5e-2, atol=5e-2)

    print("KERNEL_OK")
</pallas_src>

<mosaic_0001>
module attributes {stable_mosaic.version = 11 : i64} {
  func.func @_conv_stats_kernel(%arg0: i32, %arg1: i32, %arg2: i32, %arg3: memref<1x8x9x24xbf16, #tpu.memory_space<vmem>>, %arg4: memref<24x128xbf16, #tpu.memory_space<vmem>>, %arg5: memref<12x128xbf16, #tpu.memory_space<vmem>>, %arg6: memref<1x8x8x128xbf16, #tpu.memory_space<vmem>>, %arg7: memref<1x1x128xf32, #tpu.memory_space<vmem>>, %arg8: memref<1x1x128xf32, #tpu.memory_space<vmem>>) attributes {dimension_semantics = [#tpu.dimension_semantics<parallel>, #tpu.dimension_semantics<parallel>, #tpu.dimension_semantics<arbitrary>], iteration_bounds = array<i64: 2, 1, 1>, scalar_prefetch = 0 : i64, scratch_operands = 0 : i64, tpu.core_type = #tpu.core_type<tc>, window_params = [{transform_indices = @transform_0, window_bounds = array<i64: 1, 8, 9, 24>}, {transform_indices = @transform_1, window_bounds = array<i64: 24, 128>}, {transform_indices = @transform_2, window_bounds = array<i64: 12, 128>}, {transform_indices = @transform_3, window_bounds = array<i64: 1, 8, 8, 128>}, {transform_indices = @transform_4, window_bounds = array<i64: 1, 1, 128>}, {transform_indices = @transform_5, window_bounds = array<i64: 1, 1, 128>}]} {
    %c0 = arith.constant 0 : index
    %c0_0 = arith.constant 0 : index
    %c0_1 = arith.constant 0 : index
    %c0_2 = arith.constant 0 : index
    %0 = vector.load %arg3[%c0, %c0_0, %c0_1, %c0_2] : memref<1x8x9x24xbf16, #tpu.memory_space<vmem>>, vector<1x8x9x24xbf16>
    %1 = vector.shape_cast %0 : vector<1x8x9x24xbf16> to vector<8x9x24xbf16>
    %2 = vector.extract_strided_slice %1 {offsets = [0, 0, 0], sizes = [8, 8, 24], strides = [1, 1, 1]} : vector<8x9x24xbf16> to vector<8x8x24xbf16>
    %3 = vector.shape_cast %2 : vector<8x8x24xbf16> to vector<64x24xbf16>
    %4 = vector.extract_strided_slice %1 {offsets = [0, 1, 0], sizes = [8, 8, 12], strides = [1, 1, 1]} : vector<8x9x24xbf16> to vector<8x8x12xbf16>
    %5 = vector.shape_cast %4 : vector<8x8x12xbf16> to vector<64x12xbf16>
    %c0_3 = arith.constant 0 : index
    %c0_4 = arith.constant 0 : index
    %6 = vector.load %arg4[%c0_3, %c0_4] : memref<24x128xbf16, #tpu.memory_space<vmem>>, vector<24x128xbf16>
    %cst = arith.constant dense<0.000000e+00> : vector<64x128xf32>
    %7 = tpu.matmul %3, %6, %cst {dimension_numbers = #tpu.dot_dimension_numbers<[1], [0], [0], [1], [0, 0, 1, 1], [], []>} : vector<64x24xbf16>, vector<24x128xbf16>, vector<64x128xf32> -> vector<64x128xf32>
    %c0_5 = arith.constant 0 : index
    %c0_6 = arith.constant 0 : index
    %8 = vector.load %arg5[%c0_5, %c0_6] : memref<12x128xbf16, #tpu.memory_space<vmem>>, vector<12x128xbf16>
    %cst_7 = arith.constant dense<0.000000e+00> : vector<64x128xf32>
    %9 = tpu.matmul %5, %8, %cst_7 {dimension_numbers = #tpu.dot_dimension_numbers<[1], [0], [0], [1], [0, 0, 1, 1], [], []>} : vector<64x12xbf16>, vector<12x128xbf16>, vector<64x128xf32> -> vector<64x128xf32>
    %10 = arith.addf %7, %9 : vector<64x128xf32>
    %c0_i32 = arith.constant 0 : i32
    %11 = arith.cmpi eq, %arg2, %c0_i32 : i32
    %12 = arith.extui %11 : i1 to i32
    %c0_i32_8 = arith.constant 0 : i32
    %13 = arith.cmpi ne, %12, %c0_i32_8 : i32
    scf.if %13 {
      %cst_27 = arith.constant 0.000000e+00 : f32
      %36 = vector.broadcast %cst_27 : f32 to vector<1x128xf32>
      %c0_28 = arith.constant 0 : index
      %c0_29 = arith.constant 0 : index
      %c0_30 = arith.constant 0 : index
      %37 = vector.load %arg7[%c0_28, %c0_29, %c0_30] : memref<1x1x128xf32, #tpu.memory_space<vmem>>, vector<1x1x128xf32>
      %38 = vector.shape_cast %37 : vector<1x1x128xf32> to vector<1x128xf32>
      %39 = vector.shape_cast %36 : vector<1x128xf32> to vector<1x1x128xf32>
      tpu.vector_store %arg7[%c0_28, %c0_29, %c0_30], %39 {strides = array<i32>} : memref<1x1x128xf32, #tpu.memory_space<vmem>>, vector<1x1x128xf32>,
      %cst_31 = arith.constant 0.000000e+00 : f32
      %40 = vector.broadcast %cst_31 : f32 to vector<1x128xf32>
      %c0_32 = arith.constant 0 : index
      %c0_33 = arith.constant 0 : index
      %c0_34 = arith.constant 0 : index
      %41 = vector.load %arg8[%c0_32, %c0_33, %c0_34] : memref<1x1x128xf32, #tpu.memory_space<vmem>>, vector<1x1x128xf32>
      %42 = vector.shape_cast %41 : vector<1x1x128xf32> to vector<1x128xf32>
      %43 = vector.shape_cast %40 : vector<1x128xf32> to vector<1x1x128xf32>
      tpu.vector_store %arg8[%c0_32, %c0_33, %c0_34], %43 {strides = array<i32>} : memref<1x1x128xf32, #tpu.memory_space<vmem>>, vector<1x1x128xf32>,
    } else {
    }
    %c0_9 = arith.constant 0 : index
    %c0_10 = arith.constant 0 : index
    %c0_11 = arith.constant 0 : index
    %14 = vector.load %arg7[%c0_9, %c0_10, %c0_11] : memref<1x1x128xf32, #tpu.memory_space<vmem>>, vector<1x1x128xf32>
    %15 = vector.shape_cast %14 : vector<1x1x128xf32> to vector<1x128xf32>
    %cst_12 = arith.constant dense<0.000000e+00> : vector<128xf32>
    %16 = vector.multi_reduction <add>, %10, %cst_12 [0] : vector<64x128xf32> to vector<128xf32>
    %17 = vector.shape_cast %16 : vector<128xf32> to vector<1x128xf32>
    %18 = arith.addf %15, %17 : vector<1x128xf32>
    %c0_13 = arith.constant 0 : index
    %c0_14 = arith.constant 0 : index
    %c0_15 = arith.constant 0 : index
    %19 = vector.load %arg7[%c0_13, %c0_14, %c0_15] : memref<1x1x128xf32, #tpu.memory_space<vmem>>, vector<1x1x128xf32>
    %20 = vector.shape_cast %19 : vector<1x1x128xf32> to vector<1x128xf32>
    %21 = vector.shape_cast %18 : vector<1x128xf32> to vector<1x1x128xf32>
    tpu.vector_store %arg7[%c0_13, %c0_14, %c0_15], %21 {strides = array<i32>} : memref<1x1x128xf32, #tpu.memory_space<vmem>>, vector<1x1x128xf32>,
    %c0_16 = arith.constant 0 : index
    %c0_17 = arith.constant 0 : index
    %c0_18 = arith.constant 0 : index
    %22 = vector.load %arg8[%c0_16, %c0_17, %c0_18] : memref<1x1x128xf32, #tpu.memory_space<vmem>>, vector<1x1x128xf32>
    %23 = vector.shape_cast %22 : vector<1x1x128xf32> to vector<1x128xf32>
    %24 = arith.mulf %10, %10 : vector<64x128xf32>
    %cst_19 = arith.constant dense<0.000000e+00> : vector<128xf32>
    %25 = vector.multi_reduction <add>, %24, %cst_19 [0] : vector<64x128xf32> to vector<128xf32>
    %26 = vector.shape_cast %25 : vector<128xf32> to vector<1x128xf32>
    %27 = arith.addf %23, %26 : vector<1x128xf32>
    %c0_20 = arith.constant 0 : index
    %c0_21 = arith.constant 0 : index
    %c0_22 = arith.constant 0 : index
    %28 = vector.load %arg8[%c0_20, %c0_21, %c0_22] : memref<1x1x128xf32, #tpu.memory_space<vmem>>, vector<1x1x128xf32>
    %29 = vector.shape_cast %28 : vector<1x1x128xf32> to vector<1x128xf32>
    %30 = vector.shape_cast %27 : vector<1x128xf32> to vector<1x1x128xf32>
    tpu.vector_store %arg8[%c0_20, %c0_21, %c0_22], %30 {strides = array<i32>} : memref<1x1x128xf32, #tpu.memory_space<vmem>>, vector<1x1x128xf32>,
    %31 = vector.shape_cast %10 : vector<64x128xf32> to vector<8x8x128xf32>
    %32 = arith.truncf %31 : vector<8x8x128xf32> to vector<8x8x128xbf16>
    %c0_23 = arith.constant 0 : index
    %c0_24 = arith.constant 0 : index
    %c0_25 = arith.constant 0 : index
    %c0_26 = arith.constant 0 : index
    %33 = vector.load %arg6[%c0_23, %c0_24, %c0_25, %c0_26] : memref<1x8x8x128xbf16, #tpu.memory_space<vmem>>, vector<1x8x8x128xbf16>
    %34 = vector.shape_cast %33 : vector<1x8x8x128xbf16> to vector<8x8x128xbf16>
    %35 = vector.shape_cast %32 : vector<8x8x128xbf16> to vector<1x8x8x128xbf16>
    tpu.vector_store %arg6[%c0_23, %c0_24, %c0_25, %c0_26], %35 {strides = array<i32>} : memref<1x8x8x128xbf16, #tpu.memory_space<vmem>>, vector<1x8x8x128xbf16>,
    return
  }
  func.func @transform_0(%arg0: i32, %arg1: i32, %arg2: i32) -> (i32, i32, i32, i32) {
    %c0_i32 = arith.constant 0 : i32
    %c0_i32_0 = arith.constant 0 : i32
    %c0_i32_1 = arith.constant 0 : i32
    return %arg0, %arg2, %c0_i32, %c0_i32_0 : i32, i32, i32, i32
  }
  func.func @transform_1(%arg0: i32, %arg1: i32, %arg2: i32) -> (i32, i32) {
    %c0_i32 = arith.constant 0 : i32
    %c0_i32_0 = arith.constant 0 : i32
    return %c0_i32, %arg1 : i32, i32
  }
  func.func @transform_2(%arg0: i32, %arg1: i32, %arg2: i32) -> (i32, i32) {
    %c0_i32 = arith.constant 0 : i32
    %c0_i32_0 = arith.constant 0 : i32
    return %c0_i32, %arg1 : i32, i32
  }
  func.func @transform_3(%arg0: i32, %arg1: i32, %arg2: i32) -> (i32, i32, i32, i32) {
    %c0_i32 = arith.constant 0 : i32
    %c0_i32_0 = arith.constant 0 : i32
    return %arg0, %arg2, %c0_i32, %arg1 : i32, i32, i32, i32
  }
  func.func @transform_4(%arg0: i32, %arg1: i32, %arg2: i32) -> (i32, i32, i32) {
    %c0_i32 = arith.constant 0 : i32
    %c0_i32_0 = arith.constant 0 : i32
    return %arg0, %c0_i32, %arg1 : i32, i32, i32
  }
  func.func @transform_5(%arg0: i32, %arg1: i32, %arg2: i32) -> (i32, i32, i32) {
    %c0_i32 = arith.constant 0 : i32
    %c0_i32_0 = arith.constant 0 : i32
    return %arg0, %c0_i32, %arg1 : i32, i32, i32
  }
}

</mosaic_0001>

<llo_original>
// kernel: tpu_custom_call.1
$region0: #{tpu_custom_call.1}
  #allocation0 [shape = 'u32[]', space=smem, size = 0x4, offset = 0x4, fixed_abs, tag = 'smem constant byte address 0x4 - core index']
  #allocation1 [shape = 'u32[72,128]{1,0:T(1,128)}', space=vmem, size = 0x9000, scoped, tag = 'internal scratch']
  %s0 = inlined_call_operand.vmem [shape: bf16[2,8,9,24], index: 0, kind: input, shape index: {}]
  %s1 = inlined_call_operand.vmem [shape: bf16[24,128], index: 1, kind: input, shape index: {}]
  %s2 = inlined_call_operand.vmem [shape: bf16[12,128], index: 2, kind: input, shape index: {}]
  %s3 = inlined_call_operand.hbm [shape: bf16[2,8,8,128], index: 3, kind: output, shape index: {0}]
  %s4 = inlined_call_operand.hbm [shape: f32[2,1,128], index: 4, kind: output, shape index: {1}]
  %s5 = inlined_call_operand.hbm [shape: f32[2,1,128], index: 5, kind: output, shape index: {2}]
  %6 = xla_tuple %s3, %s4, %s5
  %s7 = sld [smem:[#allocation0]]
  $region65: #{tpu_custom_call.1} parent=0
    _
  %s9 = ssub.s32 1, %s7
  %s10 = scalar_select 0, %s9, %s7
  $region1: #{tpu_custom_call.1} parent=0
    #allocation2 [shape = 'u8[32768]{0}', space=vmem, size = 0x8000, scoped, tag = 'output window, operand 0']
    #allocation3 [shape = 's32[2]{0}', space=sflag, size = 0x8, scoped, tag = 'scoped memory for tpu_custom_call.1']
    #allocation4 [shape = 'u8[1024]{0}', space=vmem, size = 0x400, scoped, tag = 'output window, operand 1']
    #allocation5 [shape = 's32[2]{0}', space=sflag, size = 0x8, scoped, tag = 'scoped memory for tpu_custom_call.1']
    #allocation6 [shape = 'u8[1024]{0}', space=vmem, size = 0x400, scoped, tag = 'output window, operand 2']
    %11 = vsyncpa [#allocation3], 0
    %s12 = scalar_lea.sflag [#allocation3], 1
    %13 = vsyncpa %s12, 0
    %14 = vsyncpa [#allocation5], 0
    %s15 = scalar_lea.sflag [#allocation5], 1
    %16 = vsyncpa %s15, 0
    loop: start=0, step=1, limit=4
    $region2: #{tpu_custom_call.1} parent=1 // loop_pre_header
      _
    $region3: #{tpu_custom_call.1} parent=1 // loop_header
      %s18 = sphi 0, %s22
      %p19 = scmp.ge.s32.totalorder %s18, 4
      %s25 = sphi 0, %s44
      %s26 = sphi 0, %s40
      %s27 = sphi 0, %s36
      %s28 = sphi 0, %s25
      %s29 = sphi 0, %s26
      %s30 = sphi 0, %s27
      %s31 = sphi 0, %s28
      %s32 = sphi 0, %s29
      %s33 = sphi 0, %s30
      %s49 = sphi 0, %s51
      %s52 = sphi 0, %s49
      %s53 = sphi 0, %s52
      %s69 = sphi 0, %s53
      %s75 = sphi 0, %s77
      %s78 = sphi 0, %s75
      %s79 = sphi 0, %s78
      %s95 = sphi 0, %s79
      %s101 = sphi 0, %s103
      %s104 = sphi 0, %s101
      %s105 = sphi 0, %s104
      %s121 = sphi 0, %s105
      %s131 = sphi 0, %s133
      %s134 = sphi 0, %s131
      %s135 = sphi 0, %s134
      %s151 = sphi 0, %s135
      %s159 = sphi 0, %s161
      %s162 = sphi 0, %s159
      %s163 = sphi 0, %s162
      %s179 = sphi 0, %s163
      %s187 = sphi 0, %s189
      %s190 = sphi 0, %s187
      %s191 = sphi 0, %s190
      %s207 = sphi 0, %s191
    $region4: #{tpu_custom_call.1} parent=1 // loop_header_branch
      %21 = sbr.rel (%p19) target = $region8
    $region5: #{tpu_custom_call.1} parent=1 // loop_body
      %s23 = ssub.s32 %s18, 1
      %s24 = ssub.s32 %s18, 2
      %s34 = sadd.s32 1, %s27
      %p35 = scmp.ge.s32.totalorder %s34, 1
      %s36 = scalar_select %p35, 0, %s34
      %s37 = sadd.s32 1, %s26
      %s38 = scalar_select %p35, %s37, %s26
      %p39 = scmp.ge.s32.totalorder %s38, 1
      %s40 = scalar_select %p39, 0, %s38
      %s41 = sadd.s32 1, %s25
      %s42 = scalar_select %p39, %s41, %s25
      %p43 = scmp.ge.s32.totalorder %s42, 2
      %s44 = scalar_select %p43, 0, %s42
      %s45 = ssub.s32 %s25, %s44
      %s46 = ssub.s32 %s27, %s36
      %s47 = sor.u32 %s45, %s46
      %p48 = scmp.eq.s32.totalorder %s47, 0
      %s50 = sadd.s32 %s49, 1
      %s51 = scalar_select %p48, %s49, %s50
      %p54 = pneg %p48
      %p55 = scmp.eq.s32.totalorder %s18, 1
      %p56 = por %p54, %p55
      %p57 = scmp.ne.s32.totalorder %s49, %s52
      %p58 = scmp.eq.s32.totalorder %s18, 0
      %p59 = por %p57, %p58
      %p60 = scmp.ne.s32.totalorder %s49, %s52
      %p61 = scmp.eq.s32.totalorder %s23, 1
      %p62 = por %p60, %p61
      %p63 = scmp.ne.s32.totalorder %s52, %s53
      %p64 = scmp.eq.s32.totalorder %s23, 0
      %p65 = por %p63, %p64
      %p66 = scmp.ne.s32.totalorder %s52, %s53
      %p67 = scmp.eq.s32.totalorder %s24, 1
      %p68 = por %p66, %p67
      %p70 = scmp.ne.s32.totalorder %s53, %s69
      %p71 = scmp.eq.s32.totalorder %s24, 0
      %p72 = por %p70, %p71
      %s73 = ssub.s32 %s26, %s40
      %p74 = scmp.eq.s32.totalorder %s73, 0
      %s76 = sadd.s32 %s75, 1
      %s77 = scalar_select %p74, %s75, %s76
      %p80 = pneg %p74
      %p81 = scmp.eq.s32.totalorder %s18, 1
      %p82 = por %p80, %p81
      %p83 = scmp.ne.s32.totalorder %s75, %s78
      %p84 = scmp.eq.s32.totalorder %s18, 0
      %p85 = por %p83, %p84
      %p86 = scmp.ne.s32.totalorder %s75, %s78
      %p87 = scmp.eq.s32.totalorder %s23, 1
      %p88 = por %p86, %p87
      %p89 = scmp.ne.s32.totalorder %s78, %s79
      %p90 = scmp.eq.s32.totalorder %s23, 0
      %p91 = por %p89, %p90
      %p92 = scmp.ne.s32.totalorder %s78, %s79
      %p93 = scmp.eq.s32.totalorder %s24, 1
      %p94 = por %p92, %p93
      %p96 = scmp.ne.s32.totalorder %s79, %s95
      %p97 = scmp.eq.s32.totalorder %s24, 0
      %p98 = por %p96, %p97
      %s99 = ssub.s32 %s26, %s40
      %p100 = scmp.eq.s32.totalorder %s99, 0
      %s102 = sadd.s32 %s101, 1
      %s103 = scalar_select %p100, %s101, %s102
      %p106 = pneg %p100
      %p107 = scmp.eq.s32.totalorder %s18, 1
      %p108 = por %p106, %p107
      %p109 = scmp.ne.s32.totalorder %s101, %s104
      %p110 = scmp.eq.s32.totalorder %s18, 0
      %p111 = por %p109, %p110
      %p112 = scmp.ne.s32.totalorder %s101, %s104
      %p113 = scmp.eq.s32.totalorder %s23, 1
      %p114 = por %p112, %p113
      %p115 = scmp.ne.s32.totalorder %s104, %s105
      %p116 = scmp.eq.s32.totalorder %s23, 0
      %p117 = por %p115, %p116
      %p118 = scmp.ne.s32.totalorder %s104, %s105
      %p119 = scmp.eq.s32.totalorder %s24, 1
      %p120 = por %p118, %p119
      %p122 = scmp.ne.s32.totalorder %s105, %s121
      %p123 = scmp.eq.s32.totalorder %s24, 0
      %p124 = por %p122, %p123
      %s125 = ssub.s32 %s25, %s44
      %s126 = ssub.s32 %s27, %s36
      %s127 = sor.u32 %s125, %s126
      %s128 = ssub.s32 %s26, %s40
      %s129 = sor.u32 %s127, %s128
      %p130 = scmp.eq.s32.totalorder %s129, 0
      %s132 = sadd.s32 %s131, 1
      %s133 = scalar_select %p130, %s131, %s132
      %p136 = pneg %p130
      %p137 = scmp.eq.s32.totalorder %s18, 1
      %p138 = por %p136, %p137
      %p139 = scmp.ne.s32.totalorder %s131, %s134
      %p140 = scmp.eq.s32.totalorder %s18, 0
      %p141 = por %p139, %p140
      %p142 = scmp.ne.s32.totalorder %s131, %s134
      %p143 = scmp.eq.s32.totalorder %s23, 1
      %p144 = por %p142, %p143
      %p145 = scmp.ne.s32.totalorder %s134, %s135
      %p146 = scmp.eq.s32.totalorder %s23, 0
      %p147 = por %p145, %p146
      %p148 = scmp.ne.s32.totalorder %s134, %s135
      %p149 = scmp.eq.s32.totalorder %s24, 1
      %p150 = por %p148, %p149
      %p152 = scmp.ne.s32.totalorder %s135, %s151
      %p153 = scmp.eq.s32.totalorder %s24, 0
      %p154 = por %p152, %p153
      %s155 = ssub.s32 %s25, %s44
      %s156 = ssub.s32 %s26, %s40
      %s157 = sor.u32 %s155, %s156
      %p158 = scmp.eq.s32.totalorder %s157, 0
      %s160 = sadd.s32 %s159, 1
      %s161 = scalar_select %p158, %s159, %s160
      %p164 = pneg %p158
      %p165 = scmp.eq.s32.totalorder %s18, 1
      %p166 = por %p164, %p165
      %p167 = scmp.ne.s32.totalorder %s159, %s162
      %p168 = scmp.eq.s32.totalorder %s18, 0
      %p169 = por %p167, %p168
      %p170 = scmp.ne.s32.totalorder %s159, %s162
      %p171 = scmp.eq.s32.totalorder %s23, 1
      %p172 = por %p170, %p171
      %p173 = scmp.ne.s32.totalorder %s162, %s163
      %p174 = scmp.eq.s32.totalorder %s23, 0
      %p175 = por %p173, %p174
      %p176 = scmp.ne.s32.totalorder %s162, %s163
      %p177 = scmp.eq.s32.totalorder %s24, 1
      %p178 = por %p176, %p177
      %p180 = scmp.ne.s32.totalorder %s163, %s179
      %p181 = scmp.eq.s32.totalorder %s24, 0
      %p182 = por %p180, %p181
      %s183 = ssub.s32 %s25, %s44
      %s184 = ssub.s32 %s26, %s40
      %s185 = sor.u32 %s183, %s184
      %p186 = scmp.eq.s32.totalorder %s185, 0
      %s188 = sadd.s32 %s187, 1
      %s189 = scalar_select %p186, %s187, %s188
      %p192 = pneg %p186
      %p193 = scmp.eq.s32.totalorder %s18, 1
      %p194 = por %p192, %p193
      %p195 = scmp.ne.s32.totalorder %s187, %s190
      %p196 = scmp.eq.s32.totalorder %s18, 0
      %p197 = por %p195, %p196
      %p198 = scmp.ne.s32.totalorder %s187, %s190
      %p199 = scmp.eq.s32.totalorder %s23, 1
      %p200 = por %p198, %p199
      %p201 = scmp.ne.s32.totalorder %s190, %s191
      %p202 = scmp.eq.s32.totalorder %s23, 0
      %p203 = por %p201, %p202
      %p204 = scmp.ne.s32.totalorder %s190, %s191
      %p205 = scmp.eq.s32.totalorder %s24, 1
      %p206 = por %p204, %p205
      %p208 = scmp.ne.s32.totalorder %s191, %s207
      %p209 = scmp.eq.s32.totalorder %s24, 0
      %p210 = por %p208, %p209
      %p211 = scmp.le.s32.totalorder 1, %s18
      %p212 = scmp.lt.s32.totalorder %s18, 3
      %p213 = pnand %p211, %p212
      %p214 = pneg %p213
      // Predicated region
      $region9: #{tpu_custom_call.1} parent=5 // pred_check
        _
      $region10: #{tpu_custom_call.1} parent=5 // pred_check_branch
        %216 = sbr.rel (%p213) target = $region12
      $region11: #{tpu_custom_call.1} parent=5 // pred_region
        %s217 = ssub.s32 %s18, 1
        // Predicated region
        $region13: #{tpu_custom_call.1} parent=11 // pred_check
          %p218 = pneg %p91
        $region14: #{tpu_custom_call.1} parent=11 // pred_check_branch
          %220 = sbr.rel (%p218) target = $region16
        $region15: #{tpu_custom_call.1} parent=11 // pred_region
          %p221 = scmp.lt.s32.totalorder %s29, 0
          %s222 = scalar_select %p221, %s29, 0
          %s223 = smul.addr %s222, 4
          %s224 = scalar_lea.vmem %s1, %s223
        $region16: #{tpu_custom_call.1} parent=11 // pred_fallthru
          _
        // Predicated region
        $region17: #{tpu_custom_call.1} parent=11 // pred_check
          %p225 = pneg %p117
        $region18: #{tpu_custom_call.1} parent=11 // pred_check_branch
          %227 = sbr.rel (%p225) target = $region20
        $region19: #{tpu_custom_call.1} parent=11 // pred_region
          %p228 = scmp.lt.s32.totalorder %s29, 0
          %s229 = scalar_select %p228, %s29, 0
          %s230 = smul.addr %s229, 4
          %s231 = scalar_lea.vmem %s2, %s230
        $region20: #{tpu_custom_call.1} parent=11 // pred_fallthru
          _
      $region12: #{tpu_custom_call.1} parent=5 // pred_fallthru
        _
      %p232 = scmp.lt.s32.totalorder %s18, 2
      // Predicated region
      $region21: #{tpu_custom_call.1} parent=5 // pred_check
        %p233 = pneg %p232
      $region22: #{tpu_custom_call.1} parent=5 // pred_check_branch
        %235 = sbr.rel (%p233) target = $region24
      $region23: #{tpu_custom_call.1} parent=5 // pred_region
        // Predicated region
        $region25: #{tpu_custom_call.1} parent=23 // pred_check
          %p236 = pneg %p59
        $region26: #{tpu_custom_call.1} parent=23 // pred_check_branch
          %238 = sbr.rel (%p236) target = $region28
        $region27: #{tpu_custom_call.1} parent=23 // pred_region
          %s239 = smul.u32 8, %s27
          %p240 = scmp.lt.s32.totalorder %s25, 1
          %s241 = scalar_select %p240, %s25, 1
          %p242 = scmp.lt.s32.totalorder %s239, 7
          %s243 = scalar_select %p242, %s239, 7
          %s244 = smul.addr %s243, 2
          %s245 = smul.addr %s241, 16
          %s246 = sadd.s32 %s244, %s245
          %s247 = smul.addr %s246, 4
          %s248 = scalar_lea.vmem %s0, %s247
          %s249 = smul.u32 8, %s27
        $region28: #{tpu_custom_call.1} parent=23 // pred_fallthru
          _
      $region24: #{tpu_custom_call.1} parent=5 // pred_fallthru
        _
      %p250 = scmp.le.s32.totalorder 1, %s18
      %p251 = scmp.lt.s32.totalorder %s18, 3
      %p252 = pnand %p250, %p251
      %p253 = pneg %p252
      // Predicated region
      $region29: #{tpu_custom_call.1} parent=5 // pred_check
        _
      $region30: #{tpu_custom_call.1} parent=5 // pred_check_branch
        %255 = sbr.rel (%p252) target = $region32
      $region31: #{tpu_custom_call.1} parent=5 // pred_region
        %s256 = ssub.s32 %s18, 1
        %s257 = smul.u32 8, %s30
        %p258 = scmp.lt.s32.totalorder %s28, 1
        %s259 = scalar_select %p258, %s28, 1
        %p260 = scmp.lt.s32.totalorder %s257, 7
        %s261 = scalar_select %p260, %s257, 7
        %s262 = smul.addr %s261, 2
        %s263 = smul.addr %s259, 16
        %s264 = sadd.s32 %s262, %s263
        %s265 = smul.addr %s264, 4
        %s266 = scalar_lea.vmem %s0, %s265
        %p267 = pneg %p65
        %p268 = pneg %p62
        %p269 = scmp.lt.s32.totalorder %s29, 0
        %s270 = scalar_select %p269, %s29, 0
        %s271 = smul.addr %s270, 4
        %s272 = scalar_lea.vmem %s1, %s271
        %p273 = pneg %p91
        %p274 = pneg %p88
        %p275 = scmp.lt.s32.totalorder %s29, 0
        %s276 = scalar_select %p275, %s29, 0
        %s277 = smul.addr %s276, 4
        %s278 = scalar_lea.vmem %s2, %s277
        %p279 = pneg %p117
        %p280 = pneg %p114
        %p281 = pneg %p147
        %p282 = pneg %p144
        %s283 = sand.u32 %s134, 1
        %s284 = scalar_lea.sflag [#allocation3], %s283
        %s285 = sand.u32 %s134, 1
        %s286 = smul.addr %s285, 32
        %s287 = scalar_lea.vmem [#allocation2], %s286
        %p288 = pneg %p175
        %p289 = pneg %p172
        %s290 = sand.u32 %s23, 1
        %s291 = scalar_lea.sflag [#allocation5], %s290
        %s292 = sand.u32 %s162, 1
        %s293 = scalar_lea.vmem [#allocation4], %s292
        %p294 = pneg %p203
        %p295 = pneg %p200
        %s296 = sand.u32 %s23, 1
        %s297 = scalar_lea.sflag [#allocation5], %s296
        %s298 = sand.u32 %s190, 1
        %s299 = scalar_lea.vmem [#allocation6], %s298
        %s300 = smul.u32 8, %s30
        %p301 = scmp.lt.s32.totalorder %s28, 1
        %s302 = scalar_select %p301, %s28, 1
        %p303 = scmp.lt.s32.totalorder %s300, 7
        %s304 = scalar_select %p303, %s300, 7
        %s305 = smul.addr %s304, 2
        %s306 = smul.addr %s302, 16
        %s307 = sadd.s32 %s305, %s306
        %s308 = smul.addr %s307, 4
        %s309 = scalar_lea.vmem %s0, %s308
        %s310 = smul.u32 8, %s30
        %p311 = scmp.lt.s32.totalorder %s29, 0
        %s312 = scalar_select %p311, %s29, 0
        %s313 = smul.addr %s312, 4
        %s314 = scalar_lea.vmem %s1, %s313
        %p315 = scmp.lt.s32.totalorder %s29, 0
        %s316 = scalar_select %p315, %s29, 0
        %s317 = smul.addr %s316, 4
        %s318 = scalar_lea.vmem %s2, %s317
        %s319 = smul.u32 8, %s30
        %v321 = vld [vmem:[%s309] sm:$0xf]
        %v322 = vld [vmem:[%s309 + $0x4] sm:$0x1]
        %v323 = vld [vmem:[%s309 + $0x8] sm:$0xf]
        %v324 = vld [vmem:[%s309 + $0xc] sm:$0x1]
        %v325 = vld [vmem:[%s309 + $0x10] sm:$0xf]
        %v326 = vld [vmem:[%s309 + $0x14] sm:$0x1]
        %v327 = vld [vmem:[%s309 + $0x18] sm:$0xf]
        %v328 = vld [vmem:[%s309 + $0x1c] sm:$0x1]
        %v329 = vld [vmem:[%s309 + $0x20] sm:$0xf]
        %v330 = vld [vmem:[%s309 + $0x24] sm:$0x1]
        %v331 = vld [vmem:[%s309 + $0x28] sm:$0xf]
        %v332 = vld [vmem:[%s309 + $0x2c] sm:$0x1]
        %v333 = vld [vmem:[%s309 + $0x30] sm:$0xf]
        %v334 = vld [vmem:[%s309 + $0x34] sm:$0x1]
        %v335 = vld [vmem:[%s309 + $0x38] sm:$0xf]
        %v336 = vld [vmem:[%s309 + $0x3c] sm:$0x1]
        %vm337 = vsmask.f32 3328
        %vm338 = vsmask.f32 7440
        %vm339 = vmor %vm337, %vm338
        %v341 = vshrl.u32 %v321, 16
        %v343 = vrot.slane %v341, 4
        %v344 = vshll.u32 %v321, 16
        %v346 = vrot.slane %v344, 5
        %v347 = vor.u32 %v343, %v346
        %v348 = vrot.slane %v347, 4
        %v350 = vshll.u32 %v322, 16
        %v352 = vrot.slane %v350, 5
        %v353 = vsel %vm339, %v348, %v352
        %v355 = vshrl.u32 %v323, 16
        %v357 = vrot.slane %v355, 4
        %v358 = vshll.u32 %v323, 16
        %v360 = vrot.slane %v358, 5
        %v361 = vor.u32 %v357, %v360
        %v362 = vrot.slane %v361, 4
        %v364 = vshll.u32 %v324, 16
        %v366 = vrot.slane %v364, 5
        %v367 = vsel %vm339, %v362, %v366
        %v369 = vshrl.u32 %v325, 16
        %v371 = vrot.slane %v369, 4
        %v372 = vshll.u32 %v325, 16
        %v374 = vrot.slane %v372, 5
        %v375 = vor.u32 %v371, %v374
        %v376 = vrot.slane %v375, 4
        %v378 = vshll.u32 %v326, 16
        %v380 = vrot.slane %v378, 5
        %v381 = vsel %vm339, %v376, %v380
        %v383 = vshrl.u32 %v327, 16
        %v385 = vrot.slane %v383, 4
        %v386 = vshll.u32 %v327, 16
        %v388 = vrot.slane %v386, 5
        %v389 = vor.u32 %v385, %v388
        %v390 = vrot.slane %v389, 4
        %v392 = vshll.u32 %v328, 16
        %v394 = vrot.slane %v392, 5
        %v395 = vsel %vm339, %v390, %v394
        %v397 = vshrl.u32 %v329, 16
        %v399 = vrot.slane %v397, 4
        %v400 = vshll.u32 %v329, 16
        %v402 = vrot.slane %v400, 5
        %v403 = vor.u32 %v399, %v402
        %v404 = vrot.slane %v403, 4
        %v406 = vshll.u32 %v330, 16
        %v408 = vrot.slane %v406, 5
        %v409 = vsel %vm339, %v404, %v408
        %v411 = vshrl.u32 %v331, 16
        %v413 = vrot.slane %v411, 4
        %v414 = vshll.u32 %v331, 16
        %v416 = vrot.slane %v414, 5
        %v417 = vor.u32 %v413, %v416
        %v418 = vrot.slane %v417, 4
        %v420 = vshll.u32 %v332, 16
        %v422 = vrot.slane %v420, 5
        %v423 = vsel %vm339, %v418, %v422
        %v425 = vshrl.u32 %v333, 16
        %v427 = vrot.slane %v425, 4
        %v428 = vshll.u32 %v333, 16
        %v430 = vrot.slane %v428, 5
        %v431 = vor.u32 %v427, %v430
        %v432 = vrot.slane %v431, 4
        %v434 = vshll.u32 %v334, 16
        %v436 = vrot.slane %v434, 5
        %v437 = vsel %vm339, %v432, %v436
        %v439 = vshrl.u32 %v335, 16
        %v441 = vrot.slane %v439, 4
        %v442 = vshll.u32 %v335, 16
        %v444 = vrot.slane %v442, 5
        %v445 = vor.u32 %v441, %v444
        %v446 = vrot.slane %v445, 4
        %v448 = vshll.u32 %v336, 16
        %v450 = vrot.slane %v448, 5
        %v451 = vsel %vm339, %v446, %v450
        %v452 = vld [vmem:[%s314] sm:$0xf]
        %v453 = vld [vmem:[%s314 + $0x4] sm:$0xf]
        %v454 = vld [vmem:[%s314 + $0x8] sm:$0xf]
        %v455 = vld [vmem:[%s318] sm:$0xf]
        %v456 = vld [vmem:[%s318 + $0x4] sm:$0x3]
        %v457 = vunpack.c.l.b16 %v353
        %v458 = vunpack.c.l.b16 %v367
        %v459 = vunpack.c.l.b16 %v381
        %v460 = vunpack.c.l.b16 %v395
        %v461 = vunpack.c.l.b16 %v409
        %v462 = vunpack.c.l.b16 %v423
        %v463 = vunpack.c.l.b16 %v437
        %v464 = vunpack.c.l.b16 %v451
        %v465 = vpack.c.b16 %v458, %v457
        %v466 = vpack.c.b16 %v460, %v459
        %v467 = vpack.c.b16 %v462, %v461
        %v468 = vpack.c.b16 %v464, %v463
        %v471 = vunpack.c.l.b16 %v455
        %v472 = vunpack.c.l.b16 %v456
        %v473 = vpack.c.b16 %v472, %v471
        %vm474 = vcmask 97280
        %v476 = vsel %vm474, %v465, 0
        %v479 = vsel %vm474, %v466, 0
        %v482 = vsel %vm474, %v467, 0
        %v485 = vsel %vm474, %v468, 0
        %vm487 = vcmask 1045504
        %v489 = vsel %vm487, %v473, 0
        %491 = vmatpush.bf16.msra.mxu0 0
        %492 = vmatpush.bf16.msra.mxu0 0
        %493 = vmatpush.bf16.msra.mxu0 0
        %494 = vmatpush.bf16.msra.mxu0 0
        %495 = vmatpush.bf16.msra.mxu0 0
        %496 = vmatpush.bf16.msra.mxu0 0
        %497 = vmatpush.bf16.msra.mxu0 0
        %498 = vmatpush.bf16.msra.mxu0 %v489
        %499 = vmatmul.bf16.gmra.mxu0 %v476
        %v500 = vpop.f32.mrf.mxu0
        %v501 = vadd.f32 0.0, %v500
        %v502 = vpop.f32.mrf.mxu0
        %v503 = vadd.f32 0.0, %v502
        %504 = vmatmul.bf16.gmra.mxu0 %v479
        %v505 = vpop.f32.mrf.mxu0
        %v506 = vadd.f32 0.0, %v505
        %v507 = vpop.f32.mrf.mxu0
        %v508 = vadd.f32 0.0, %v507
        %509 = vmatmul.bf16.gmra.mxu0 %v482
        %v510 = vpop.f32.mrf.mxu0
        %v511 = vadd.f32 0.0, %v510
        %v512 = vpop.f32.mrf.mxu0
        %v513 = vadd.f32 0.0, %v512
        %514 = vmatmul.bf16.gmra.mxu0 %v485
        %v515 = vpop.f32.mrf.mxu0
        %v516 = vadd.f32 0.0, %v515
        %v517 = vpop.f32.mrf.mxu0
        %v518 = vadd.f32 0.0, %v517
        %519 = vdwg.mxu0
        %v528 = vunpack.c.l.b16 %v321
        %v529 = vunpack.c.l.b16 %v323
        %v530 = vunpack.c.l.b16 %v325
        %v531 = vunpack.c.l.b16 %v327
        %v532 = vunpack.c.l.b16 %v329
        %v533 = vunpack.c.l.b16 %v331
        %v534 = vunpack.c.l.b16 %v333
        %v535 = vunpack.c.l.b16 %v335
        %v536 = vpack.c.b16 %v529, %v528
        %v537 = vpack.c.b16 %v531, %v530
        %v538 = vpack.c.b16 %v533, %v532
        %v539 = vpack.c.b16 %v535, %v534
        %v543 = vunpack.c.l.b16 %v452
        %v544 = vunpack.c.l.b16 %v453
        %v545 = vunpack.c.l.b16 %v454
        %v546 = vpack.c.b16 %v544, %v543
        %v547 = vpack.c.b16 %v545, %v545
        %vm549 = vcmask 195584
        %v551 = vsel %vm549, %v536, 0
        %v554 = vsel %vm549, %v537, 0
        %v557 = vsel %vm549, %v538, 0
        %v560 = vsel %vm549, %v539, 0
        %vm562 = vcmask 1043456
        %v564 = vsel %vm562, %v547, 0
        %566 = vmatpush.bf16.msra.mxu0 0
        %567 = vmatpush.bf16.msra.mxu0 0
        %568 = vmatpush.bf16.msra.mxu0 0
        %569 = vmatpush.bf16.msra.mxu0 0
        %570 = vmatpush.bf16.msra.mxu0 0
        %571 = vmatpush.bf16.msra.mxu0 0
        %572 = vmatpush.bf16.msra.mxu0 %v564
        %573 = vmatpush.bf16.msra.mxu0 %v546
        %574 = vmatmul.bf16.gmra.mxu0 %v551
        %v575 = vpop.f32.mrf.mxu0
        %v576 = vadd.f32 %v501, %v575
        %v577 = vpop.f32.mrf.mxu0
        %v578 = vadd.f32 %v503, %v577
        %579 = vmatmul.bf16.gmra.mxu0 %v554
        %v580 = vpop.f32.mrf.mxu0
        %v581 = vadd.f32 %v506, %v580
        %v582 = vpop.f32.mrf.mxu0
        %v583 = vadd.f32 %v508, %v582
        %584 = vmatmul.bf16.gmra.mxu0 %v557
        %v585 = vpop.f32.mrf.mxu0
        %v586 = vadd.f32 %v511, %v585
        %v587 = vpop.f32.mrf.mxu0
        %v588 = vadd.f32 %v513, %v587
        %589 = vmatmul.bf16.gmra.mxu0 %v560
        %v590 = vpop.f32.mrf.mxu0
        %v591 = vadd.f32 %v516, %v590
        %v592 = vpop.f32.mrf.mxu0
        %v593 = vadd.f32 %v518, %v592
        %594 = vdwg.mxu0
        %p595 = scmp.eq.s32.totalorder %s30, 0
        // Predicated region
        $region33: #{tpu_custom_call.1} parent=31 // pred_check
          %p596 = pneg %p595
        $region34: #{tpu_custom_call.1} parent=31 // pred_check_branch
          %598 = sbr.rel (%p596) target = $region36
        $region35: #{tpu_custom_call.1} parent=31 // pred_region
          %599 = vst [vmem:[%s293] sm:$0x1] 0.0
          %600 = vst [vmem:[%s299] sm:$0x1] 0.0
        $region36: #{tpu_custom_call.1} parent=31 // pred_fallthru
          _
        %v601 = vld [vmem:[%s293] sm:$0x1]
        %v602 = vadd.f32 %v576, %v578
        %v603 = vadd.f32 %v602, %v581
        %v604 = vadd.f32 %v603, %v583
        %v605 = vadd.f32 %v604, %v586
        %v606 = vadd.f32 %v605, %v588
        %v607 = vadd.f32 %v606, %v591
        %v608 = vadd.f32 %v607, %v593
        %v609 = vrot.slane %v608, 4
        %v610 = vadd.f32 %v608, %v609
        %v611 = vrot.slane %v610, 2
        %v612 = vadd.f32 %v610, %v611
        %v613 = vrot.slane %v612, 1
        %v614 = vadd.f32 %v612, %v613
        %v615 = vadd.f32 %v601, %v614
        %616 = vst [vmem:[%s293] sm:$0x1] %v615
        %v617 = vld [vmem:[%s299] sm:$0x1]
        %v618 = vmul.f32 %v576, %v576
        %v619 = vmul.f32 %v578, %v578
        %v620 = vmul.f32 %v581, %v581
        %v621 = vmul.f32 %v583, %v583
        %v622 = vmul.f32 %v586, %v586
        %v623 = vmul.f32 %v588, %v588
        %v624 = vmul.f32 %v591, %v591
        %v625 = vmul.f32 %v593, %v593
        %v626 = vadd.f32 %v618, %v619
        %v627 = vadd.f32 %v626, %v620
        %v628 = vadd.f32 %v627, %v621
        %v629 = vadd.f32 %v628, %v622
        %v630 = vadd.f32 %v629, %v623
        %v631 = vadd.f32 %v630, %v624
        %v632 = vadd.f32 %v631, %v625
        %v633 = vrot.slane %v632, 4
        %v634 = vadd.f32 %v632, %v633
        %v635 = vrot.slane %v634, 2
        %v636 = vadd.f32 %v634, %v635
        %v637 = vrot.slane %v636, 1
        %v638 = vadd.f32 %v636, %v637
        %v639 = vadd.f32 %v617, %v638
        %640 = vst [vmem:[%s299] sm:$0x1] %v639
        %v641 = vpack.c.bf16 %v576, %v576
        %v642 = vpack.c.bf16 %v578, %v578
        %v643 = vpack.c.bf16 %v581, %v581
        %v644 = vpack.c.bf16 %v583, %v583
        %v645 = vpack.c.bf16 %v586, %v586
        %v646 = vpack.c.bf16 %v588, %v588
        %v647 = vpack.c.bf16 %v591, %v591
        %v648 = vpack.c.bf16 %v593, %v593
        %649 = vst [vmem:[%s287] sm:$0xf] %v641
        %650 = vst [vmem:[%s287 + $0x4] sm:$0xf] %v642
        %651 = vst [vmem:[%s287 + $0x8] sm:$0xf] %v643
        %652 = vst [vmem:[%s287 + $0xc] sm:$0xf] %v644
        %653 = vst [vmem:[%s287 + $0x10] sm:$0xf] %v645
        %654 = vst [vmem:[%s287 + $0x14] sm:$0xf] %v646
        %655 = vst [vmem:[%s287 + $0x18] sm:$0xf] %v647
        %656 = vst [vmem:[%s287 + $0x1c] sm:$0xf] %v648
        %s657 = sand.u32 %s134, 1
        %s658 = scalar_lea.sflag [#allocation3], %s657
        %s659 = sand.u32 %s134, 1
        %s660 = smul.addr %s659, 32
        %s661 = scalar_lea.vmem [#allocation2], %s660
        %s662 = sand.u32 %s23, 1
        %s663 = scalar_lea.sflag [#allocation5], %s662
        %s664 = sand.u32 %s162, 1
        %s665 = scalar_lea.vmem [#allocation4], %s664
        %s666 = sand.u32 %s23, 1
        %s667 = scalar_lea.sflag [#allocation5], %s666
        %s668 = sand.u32 %s190, 1
        %s669 = scalar_lea.vmem [#allocation6], %s668
        // Predicated region
        $region37: #{tpu_custom_call.1} parent=31 // pred_check
          %p670 = pneg %p144
        $region38: #{tpu_custom_call.1} parent=31 // pred_check_branch
          %672 = sbr.rel (%p670) target = $region40
        $region39: #{tpu_custom_call.1} parent=31 // pred_region
          %s673 = smul.u32 8, %s30
          %675 = vsyncadd %s658, 0
          %s676 = sadd.s32 %s29, %s673
          %s677 = smul.addr %s28, 8
          %s678 = sadd.s32 %s676, %s677
          %s679 = smul.addr %s678, 4
          %s680 = scalar_lea.hbm %s3, %s679
          %s681 = sshll.u32 %s661, 4
          %s682 = int_to_ptr.vmem [resolvable:$true] %s681
          %s683 = sshll.u32 %s680, 4
          %s684 = int_to_ptr.hbm [resolvable:$true] %s683
          %689 = dma.vmem_to_hbm [thread:$0]  %s682, 512, %s684, %s658, 64, 64, 4
        $region40: #{tpu_custom_call.1} parent=31 // pred_fallthru
          _
        // Predicated region
        $region41: #{tpu_custom_call.1} parent=31 // pred_check
          %p690 = pneg %p172
        $region42: #{tpu_custom_call.1} parent=31 // pred_check_branch
          %692 = sbr.rel (%p690) target = $region44
        $region43: #{tpu_custom_call.1} parent=31 // pred_region
          %694 = vsyncadd %s663, 0
          %s695 = sadd.s32 %s29, %s28
          %s696 = scalar_lea.hbm %s4, %s695
          %s698 = sshll.u32 %s665, 4
          %s699 = int_to_ptr.vmem [resolvable:$true] %s698
          %s700 = sshll.u32 %s696, 4
          %s701 = int_to_ptr.hbm [resolvable:$true] %s700
          %703 = dma.vmem_to_hbm [thread:$0]  %s699, 16, %s701, %s663
        $region44: #{tpu_custom_call.1} parent=31 // pred_fallthru
          _
        // Predicated region
        $region45: #{tpu_custom_call.1} parent=31 // pred_check
          %p704 = pneg %p200
        $region46: #{tpu_custom_call.1} parent=31 // pred_check_branch
          %706 = sbr.rel (%p704) target = $region48
        $region47: #{tpu_custom_call.1} parent=31 // pred_region
          %708 = vsyncadd %s667, 0
          %s709 = sadd.s32 %s29, %s28
          %s710 = scalar_lea.hbm %s5, %s709
          %s712 = sshll.u32 %s669, 4
          %s713 = int_to_ptr.vmem [resolvable:$true] %s712
          %s714 = sshll.u32 %s710, 4
          %s715 = int_to_ptr.hbm [resolvable:$true] %s714
          %717 = dma.vmem_to_hbm [thread:$0]  %s713, 16, %s715, %s667
        $region48: #{tpu_custom_call.1} parent=31 // pred_fallthru
          _
      $region32: #{tpu_custom_call.1} parent=5 // pred_fallthru
        _
      %p718 = scmp.le.s32.totalorder 2, %s18
      // Predicated region
      $region49: #{tpu_custom_call.1} parent=5 // pred_check
        %p719 = pneg %p718
      $region50: #{tpu_custom_call.1} parent=5 // pred_check_branch
        %721 = sbr.rel (%p719) target = $region52
      $region51: #{tpu_custom_call.1} parent=5 // pred_region
        %s722 = ssub.s32 %s18, 2
        // Predicated region
        $region53: #{tpu_custom_call.1} parent=51 // pred_check
          %p723 = pneg %p150
        $region54: #{tpu_custom_call.1} parent=51 // pred_check_branch
          %725 = sbr.rel (%p723) target = $region56
        $region55: #{tpu_custom_call.1} parent=51 // pred_region
          %s726 = sand.u32 %s135, 1
          %s727 = scalar_lea.sflag [#allocation3], %s726
          %s728 = sand.u32 %s135, 1
          %s729 = smul.addr %s728, 32
          %s730 = scalar_lea.vmem [#allocation2], %s729
          %732 = dma.done %s727, 512
        $region56: #{tpu_custom_call.1} parent=51 // pred_fallthru
          _
        // Predicated region
        $region57: #{tpu_custom_call.1} parent=51 // pred_check
          %p733 = pneg %p178
        $region58: #{tpu_custom_call.1} parent=51 // pred_check_branch
          %735 = sbr.rel (%p733) target = $region60
        $region59: #{tpu_custom_call.1} parent=51 // pred_region
          %s736 = sand.u32 %s24, 1
          %s737 = scalar_lea.sflag [#allocation5], %s736
          %s738 = sand.u32 %s163, 1
          %s739 = scalar_lea.vmem [#allocation4], %s738
          %741 = dma.done %s737, 16
        $region60: #{tpu_custom_call.1} parent=51 // pred_fallthru
          _
        // Predicated region
        $region61: #{tpu_custom_call.1} parent=51 // pred_check
          %p742 = pneg %p206
        $region62: #{tpu_custom_call.1} parent=51 // pred_check_branch
          %744 = sbr.rel (%p742) target = $region64
        $region63: #{tpu_custom_call.1} parent=51 // pred_region
          %s745 = sand.u32 %s24, 1
          %s746 = scalar_lea.sflag [#allocation5], %s745
          %s747 = sand.u32 %s191, 1
          %s748 = scalar_lea.vmem [#allocation6], %s747
          %750 = dma.done %s746, 16
        $region64: #{tpu_custom_call.1} parent=51 // pred_fallthru
          _
      $region52: #{tpu_custom_call.1} parent=5 // pred_fallthru
        _
    $region6: #{tpu_custom_call.1} parent=1 // loop_footer
      %s22 = sadd.s32 1, %s18
    $region7: #{tpu_custom_call.1} parent=1 // loop_footer_branch
      %17 = sbr.rel target = $region3
    $region8: #{tpu_custom_call.1} parent=1 // loop_exit
      _
    %751 = vsyncpa [#allocation3], 1
    %s752 = scalar_lea.sflag [#allocation3], 1
    %753 = vsyncpa %s752, 1
    %754 = vsyncpa [#allocation5], 1
    %s755 = scalar_lea.sflag [#allocation5], 1
    %756 = vsyncpa %s755, 1

</llo_original>
